<compile_context>
chip_gen: v7x
topology: tpu7x:2x2x1
jax: 0.10.0
libtpu: 0.0.40
codegen_flags: <defaults>
</compile_context>

<pallas_src>
import numpy as np
import jax
import jax.numpy as jnp
from jax.experimental import pallas as pl
from jax.experimental.pallas import tpu as pltpu


# ---------------------------------------------------------------------------
# Deterministic parameter construction (mirrors BicubicDownSample.__init__)
# ---------------------------------------------------------------------------
def _bicubic_kernel_scalar(x, a=-0.5):
    ax = abs(float(x))
    if ax <= 1.0:
        return (a + 2.0) * ax ** 3 - (a + 3.0) * ax ** 2 + 1.0
    elif 1.0 < ax < 2.0:
        return a * ax ** 3 - 5.0 * a * ax ** 2 + 8.0 * a * ax - 4.0 * a
    return 0.0


def make_bicubic_taps(factor=4):
    size = factor * 4
    k = np.array(
        [_bicubic_kernel_scalar((i - np.floor(size / 2) + 0.5) / factor)
         for i in range(size)],
        dtype=np.float32,
    )
    return k / np.sum(k)


def _reflect_indices(n, pad_lo, pad_hi):
    """Source index for each position of a reflect-padded axis of length n."""
    v = np.arange(-pad_lo, n + pad_hi)
    v = np.where(v < 0, -v, v)
    v = np.where(v >= n, 2 * (n - 1) - v, v)
    return v


def make_folded_matrices(factor, H, W):
    """Build A' (Ho, H) and B' (W, Wo) with reflect padding folded in.

    out = A_pad @ (P_H @ x @ P_W^T) @ B_pad = (A_pad @ P_H) @ x @ (P_W^T @ B_pad)
    """
    size = factor * 4
    k = make_bicubic_taps(factor)
    pad = size - factor
    pt, pb = pad // 2, pad - pad // 2
    assert H > max(pt, pb) and W > max(pt, pb), (
        "reflect padding requires H, W >= pad/2 + 1 (PyTorch 'reflect' limit)")
    Hp, Wp = H + pad, W + pad
    Ho, Wo = (Hp - size) // factor + 1, (Wp - size) // factor + 1

    # Banded conv matrices on the padded axes.
    A_pad = np.zeros((Ho, Hp), np.float32)
    for h in range(Ho):
        A_pad[h, factor * h: factor * h + size] = k
    B_pad = np.zeros((Wp, Wo), np.float32)
    for w in range(Wo):
        B_pad[factor * w: factor * w + size, w] = k

    # Reflection selection matrices, folded into the conv matrices.
    hi = _reflect_indices(H, pt, pb)
    wi = _reflect_indices(W, pt, pb)
    P_H = np.zeros((Hp, H), np.float32)
    P_H[np.arange(Hp), hi] = 1.0
    P_W = np.zeros((Wp, W), np.float32)
    P_W[np.arange(Wp), wi] = 1.0

    A = A_pad @ P_H          # (Ho, H)
    B = P_W.T @ B_pad        # (W, Wo)
    return jnp.asarray(A), jnp.asarray(B), Ho, Wo


# ---------------------------------------------------------------------------
# Pallas kernel: G images per grid step.
#   horizontal pass: per-image (H, W) @ (W, Wo) matmuls, packed side-by-side
#                    along lanes into a (H, G*Wo) VMEM scratch
#   vertical pass  : ONE MXU matmul (Ho, H) @ (H, G*Wo) -> lane-dense output
# ---------------------------------------------------------------------------
def _bicubic_kernel(x_ref, b_ref, a_ref, o_ref, t_ref):
    # x_ref: (G, H, W)   b_ref: (W, Wo)   a_ref: (Ho, H)
    # o_ref: (Ho, G*Wo)  t_ref: (H, G*Wo) scratch
    G = x_ref.shape[0]
    Wo = b_ref.shape[1]

    # Horizontal pass.  G is a small static int, so this loop is unrolled at
    # trace time; packing the results along lanes makes the vertical pass's
    # RHS (and therefore the output stores) lane-dense.
    for g in range(G):
        t_ref[:, g * Wo:(g + 1) * Wo] = jnp.dot(
            x_ref[g], b_ref[...], preferred_element_type=jnp.float32)

    # Vertical pass: a single full-MXU matmul with N = G*Wo (no broadcast
    # copies of A', no per-image tiny dots).
    o_ref[...] = jnp.dot(a_ref[...], t_ref[...],
                         preferred_element_type=jnp.float32).astype(o_ref.dtype)


# ---------------------------------------------------------------------------
# Block-size / VMEM sizing (one footprint formula drives both)
# ---------------------------------------------------------------------------
def _per_step_vmem_bytes(G, H, W, Ho, Wo):
    """f32 VMEM footprint of one grid step."""
    return 4 * (
        2 * G * H * W            # input block (double-buffered by the pipeline)
        + 2 * Ho * G * Wo        # output block (double-buffered)
        + 2 * (W * Wo + Ho * H)  # A', B' constants (double-buffered)
        + H * G * Wo             # packed horizontal-pass scratch
    )


def _vmem_budgets():
    """(per-step block budget, scoped-vmem cap), sized from the chip's VMEM."""
    try:
        phys = int(pltpu.get_tpu_info().vmem_capacity_bytes)
    except Exception:            # interpret mode / older jax: assume 128 MiB parts
        phys = 128 << 20
    if phys <= (64 << 20):       # v7x-class: 64 MiB physical VMEM per TensorCore
        return 10 << 20, 40 << 20
    return 28 << 20, 64 << 20    # v5e / v6e: 128 MiB physical VMEM


def _pick_images_per_block(NC, H, W, Ho, Wo, budget_bytes, max_g=32):
    """Largest divisor of NC whose per-step footprint fits the budget.

    Capped at NC // 2 so the grid always has >= 2 steps (both v7x TensorCores
    get work through the "parallel" axis) and at max_g to bound trace-time
    unrolling.  Always respects the budget; worst case G = 1.
    """
    g_cap = NC if NC < 2 else max(1, min(NC // 2, max_g))
    best = 1
    for g in range(1, g_cap + 1):
        if NC % g == 0 and _per_step_vmem_bytes(g, H, W, Ho, Wo) <= budget_bytes:
            best = g
    return best


def bicubic_downsample(x, factor=4):
    """x: (N, 3, H, W) float32, NCHW.  Returns (N, 3, H//factor, W//factor)."""
    N, C, H, W = x.shape
    A, B, Ho, Wo = make_folded_matrices(factor, H, W)
    NC = N * C

    budget, limit_cap = _vmem_budgets()
    G = _pick_images_per_block(NC, H, W, Ho, Wo, budget)
    num_blocks = NC // G
    GWo = G * Wo

    per_step = _per_step_vmem_bytes(G, H, W, Ho, Wo)
    vmem_limit = int(min(max(per_step * 5 // 4 + (2 << 20), 32 << 20), limit_cap))
    # TODO(synk): for images where even G=1 exceeds the scoped-VMEM cap, add a
    #             W-tile grid axis (an output tile of width Two only needs a
    #             4*Two+12 wide input window thanks to the band structure).

    x3d = x.reshape(NC, H, W)    # free metadata reshape (contiguous)

    out = pl.pallas_call(
        _bicubic_kernel,
        out_shape=jax.ShapeDtypeStruct((num_blocks, Ho, GWo), x.dtype),
        grid=(num_blocks,),
        in_specs=[
            pl.BlockSpec((G, H, W), lambda i: (i, 0, 0)),
            # A'/B' have grid-invariant index_maps -> no re-DMA across steps.
            # TODO(synk): single-buffer them (pipeline_mode=pl.Buffered(1)) to
            #             drop the duplicate O((H^2+W^2)/4) VMEM copy on v7x.
            pl.BlockSpec((W, Wo), lambda i: (0, 0)),
            pl.BlockSpec((Ho, H), lambda i: (0, 0)),
        ],
        # Lane-dense output block: last dim is G*Wo (one contiguous slab/step).
        out_specs=pl.BlockSpec((None, Ho, GWo), lambda i: (i, 0, 0)),
        scratch_shapes=[pltpu.VMEM((H, GWo), jnp.float32)],
        compiler_params=pltpu.CompilerParams(
            dimension_semantics=("parallel",),
            vmem_limit_bytes=vmem_limit,
        ),
    )(x3d, B, A)

    # (num_blocks, Ho, G*Wo) -> (N, C, Ho, Wo): cheap XLA-side relayout.
    out = out.reshape(num_blocks, Ho, G, Wo).transpose(0, 2, 1, 3)
    return out.reshape(N, C, Ho, Wo)


# ---------------------------------------------------------------------------
# Pure-JAX reference (mirrors the PyTorch forward exactly)
# ---------------------------------------------------------------------------
def reference_forward(x, factor=4):
    k = jnp.asarray(make_bicubic_taps(factor))
    size = factor * 4
    pad = size - factor
    pt, pb = pad // 2, pad - pad // 2
    xh = jnp.pad(x, ((0, 0), (0, 0), (pt, pb), (0, 0)), mode="reflect")
    w1 = jnp.tile(k.reshape(1, 1, size, 1), (3, 1, 1, 1))  # OIHW, groups=3
    y = jax.lax.conv_general_dilated(
        xh, w1, window_strides=(factor, 1), padding="VALID",
        dimension_numbers=("NCHW", "OIHW", "NCHW"), feature_group_count=3)
    yw = jnp.pad(y, ((0, 0), (0, 0), (0, 0), (pt, pb)), mode="reflect")
    w2 = jnp.tile(k.reshape(1, 1, 1, size), (3, 1, 1, 1))
    out = jax.lax.conv_general_dilated(
        yw, w2, window_strides=(1, factor), padding="VALID",
        dimension_numbers=("NCHW", "OIHW", "NCHW"), feature_group_count=3)
    return out


if __name__ == "__main__":
    key = jax.random.PRNGKey(0)
    N, C, H, W = 2, 3, 16, 16          # module hard-codes 3 channels (groups=3)
    x = jax.random.uniform(key, (N, C, H, W), dtype=jnp.float32) * 255.0

    out = jax.block_until_ready(bicubic_downsample(x, factor=4))
    ref = jax.block_until_ready(reference_forward(x, factor=4))

    assert out.shape == (N, C, H // 4, W // 4), out.shape
    np.testing.assert_allclose(np.asarray(out), np.asarray(ref),
                               rtol=1e-4, atol=1e-3)
    print("KERNEL_OK")
</pallas_src>

<mosaic_0001>
module attributes {stable_mosaic.version = 11 : i64} {
  func.func @_bicubic_kernel(%arg0: i32, %arg1: memref<3x16x16xf32, #tpu.memory_space<vmem>>, %arg2: memref<16x4xf32, #tpu.memory_space<vmem>>, %arg3: memref<4x16xf32, #tpu.memory_space<vmem>>, %arg4: memref<1x4x12xf32, #tpu.memory_space<vmem>>, %arg5: memref<16x12xf32, #tpu.memory_space<vmem>>) attributes {dimension_semantics = [#tpu.dimension_semantics<parallel>], iteration_bounds = array<i64: 2>, scalar_prefetch = 0 : i64, scratch_operands = 1 : i64, tpu.core_type = #tpu.core_type<tc>, window_params = [{transform_indices = @transform_0, window_bounds = array<i64: 3, 16, 16>}, {pipeline_mode = #tpu.pipeline_mode<synchronous>, transform_indices = @transform_1, window_bounds = array<i64: 16, 4>}, {pipeline_mode = #tpu.pipeline_mode<synchronous>, transform_indices = @transform_2, window_bounds = array<i64: 4, 16>}, {transform_indices = @transform_3, window_bounds = array<i64: 1, 4, 12>}]} {
    %c0 = arith.constant 0 : index
    %c0_0 = arith.constant 0 : index
    %c0_1 = arith.constant 0 : index
    %0 = vector.load %arg1[%c0, %c0_0, %c0_1] : memref<3x16x16xf32, #tpu.memory_space<vmem>>, vector<1x16x16xf32>
    %1 = vector.shape_cast %0 : vector<1x16x16xf32> to vector<16x16xf32>
    %c0_2 = arith.constant 0 : index
    %c0_3 = arith.constant 0 : index
    %2 = vector.load %arg2[%c0_2, %c0_3] : memref<16x4xf32, #tpu.memory_space<vmem>>, vector<16x4xf32>
    %cst = arith.constant dense<0.000000e+00> : vector<16x4xf32>
    %3 = tpu.matmul %1, %2, %cst {dimension_numbers = #tpu.dot_dimension_numbers<[1], [0], [0], [1], [0, 0, 1, 1], [], []>} : vector<16x16xf32>, vector<16x4xf32>, vector<16x4xf32> -> vector<16x4xf32>
    %c0_4 = arith.constant 0 : index
    %c0_5 = arith.constant 0 : index
    %4 = vector.load %arg5[%c0_4, %c0_5] : memref<16x12xf32, #tpu.memory_space<vmem>>, vector<16x4xf32>
    tpu.vector_store %arg5[%c0_4, %c0_5], %3 {strides = array<i32>} : memref<16x12xf32, #tpu.memory_space<vmem>>, vector<16x4xf32>,
    %c1 = arith.constant 1 : index
    %c0_6 = arith.constant 0 : index
    %c0_7 = arith.constant 0 : index
    %5 = vector.load %arg1[%c1, %c0_6, %c0_7] : memref<3x16x16xf32, #tpu.memory_space<vmem>>, vector<1x16x16xf32>
    %6 = vector.shape_cast %5 : vector<1x16x16xf32> to vector<16x16xf32>
    %c0_8 = arith.constant 0 : index
    %c0_9 = arith.constant 0 : index
    %7 = vector.load %arg2[%c0_8, %c0_9] : memref<16x4xf32, #tpu.memory_space<vmem>>, vector<16x4xf32>
    %cst_10 = arith.constant dense<0.000000e+00> : vector<16x4xf32>
    %8 = tpu.matmul %6, %7, %cst_10 {dimension_numbers = #tpu.dot_dimension_numbers<[1], [0], [0], [1], [0, 0, 1, 1], [], []>} : vector<16x16xf32>, vector<16x4xf32>, vector<16x4xf32> -> vector<16x4xf32>
    %c0_11 = arith.constant 0 : index
    %c4 = arith.constant 4 : index
    %9 = vector.load %arg5[%c0_11, %c4] : memref<16x12xf32, #tpu.memory_space<vmem>>, vector<16x4xf32>
    tpu.vector_store %arg5[%c0_11, %c4], %8 {strides = array<i32>} : memref<16x12xf32, #tpu.memory_space<vmem>>, vector<16x4xf32>,
    %c2 = arith.constant 2 : index
    %c0_12 = arith.constant 0 : index
    %c0_13 = arith.constant 0 : index
    %10 = vector.load %arg1[%c2, %c0_12, %c0_13] : memref<3x16x16xf32, #tpu.memory_space<vmem>>, vector<1x16x16xf32>
    %11 = vector.shape_cast %10 : vector<1x16x16xf32> to vector<16x16xf32>
    %c0_14 = arith.constant 0 : index
    %c0_15 = arith.constant 0 : index
    %12 = vector.load %arg2[%c0_14, %c0_15] : memref<16x4xf32, #tpu.memory_space<vmem>>, vector<16x4xf32>
    %cst_16 = arith.constant dense<0.000000e+00> : vector<16x4xf32>
    %13 = tpu.matmul %11, %12, %cst_16 {dimension_numbers = #tpu.dot_dimension_numbers<[1], [0], [0], [1], [0, 0, 1, 1], [], []>} : vector<16x16xf32>, vector<16x4xf32>, vector<16x4xf32> -> vector<16x4xf32>
    %c0_17 = arith.constant 0 : index
    %c8 = arith.constant 8 : index
    %14 = vector.load %arg5[%c0_17, %c8] : memref<16x12xf32, #tpu.memory_space<vmem>>, vector<16x4xf32>
    tpu.vector_store %arg5[%c0_17, %c8], %13 {strides = array<i32>} : memref<16x12xf32, #tpu.memory_space<vmem>>, vector<16x4xf32>,
    %c0_18 = arith.constant 0 : index
    %c0_19 = arith.constant 0 : index
    %15 = vector.load %arg3[%c0_18, %c0_19] : memref<4x16xf32, #tpu.memory_space<vmem>>, vector<4x16xf32>
    %c0_20 = arith.constant 0 : index
    %c0_21 = arith.constant 0 : index
    %16 = vector.load %arg5[%c0_20, %c0_21] : memref<16x12xf32, #tpu.memory_space<vmem>>, vector<16x12xf32>
    %cst_22 = arith.constant dense<0.000000e+00> : vector<4x12xf32>
    %17 = tpu.matmul %15, %16, %cst_22 {dimension_numbers = #tpu.dot_dimension_numbers<[1], [0], [0], [1], [0, 0, 1, 1], [], []>} : vector<4x16xf32>, vector<16x12xf32>, vector<4x12xf32> -> vector<4x12xf32>
    %c0_23 = arith.constant 0 : index
    %c0_24 = arith.constant 0 : index
    %c0_25 = arith.constant 0 : index
    %18 = vector.load %arg4[%c0_23, %c0_24, %c0_25] : memref<1x4x12xf32, #tpu.memory_space<vmem>>, vector<1x4x12xf32>
    %19 = vector.shape_cast %18 : vector<1x4x12xf32> to vector<4x12xf32>
    %20 = vector.shape_cast %17 : vector<4x12xf32> to vector<1x4x12xf32>
    tpu.vector_store %arg4[%c0_23, %c0_24, %c0_25], %20 {strides = array<i32>} : memref<1x4x12xf32, #tpu.memory_space<vmem>>, vector<1x4x12xf32>,
    return
  }
  func.func @transform_0(%arg0: i32) -> (i32, i32, i32) {
    %c0_i32 = arith.constant 0 : i32
    %c0_i32_0 = arith.constant 0 : i32
    %c0_i32_1 = arith.constant 0 : i32
    return %arg0, %c0_i32, %c0_i32_0 : i32, i32, i32
  }
  func.func @transform_1(%arg0: i32) -> (i32, i32) {
    %c0_i32 = arith.constant 0 : i32
    %c0_i32_0 = arith.constant 0 : i32
    %c0_i32_1 = arith.constant 0 : i32
    return %c0_i32, %c0_i32_0 : i32, i32
  }
  func.func @transform_2(%arg0: i32) -> (i32, i32) {
    %c0_i32 = arith.constant 0 : i32
    %c0_i32_0 = arith.constant 0 : i32
    %c0_i32_1 = arith.constant 0 : i32
    return %c0_i32, %c0_i32_0 : i32, i32
  }
  func.func @transform_3(%arg0: i32) -> (i32, i32, i32) {
    %c0_i32 = arith.constant 0 : i32
    %c0_i32_0 = arith.constant 0 : i32
    %c0_i32_1 = arith.constant 0 : i32
    return %arg0, %c0_i32, %c0_i32_0 : i32, i32, i32
  }
}

</mosaic_0001>

<llo_original>
// kernel: tpu_custom_call.1
$region0: #{tpu_custom_call.1}
  #allocation0 [shape = 'u32[]', space=smem, size = 0x4, offset = 0x4, fixed_abs, tag = 'smem constant byte address 0x4 - core index']
  #allocation1 [shape = 'u32[144,128]{1,0:T(1,128)}', space=vmem, size = 0x12000, scoped, tag = 'internal scratch']
  #allocation2 [shape = 'f32[16,12]{1,0:T(8,128)}', space=vmem, size = 0x2000, scoped, tag = 'scratch operand']
  %s0 = inlined_call_operand.hbm [shape: f32[6,16,16], index: 0, kind: input, shape index: {}]
  %s1 = inlined_call_operand.vmem [shape: f32[16,4], index: 1, kind: input, shape index: {}]
  %s2 = inlined_call_operand.vmem [shape: f32[4,16], index: 2, kind: input, shape index: {}]
  %s3 = inlined_call_operand.hbm [shape: f32[2,4,12], index: 3, kind: output, shape index: {}]
  %s4 = sld [smem:[#allocation0]]
  $region49: #{tpu_custom_call.1} parent=0
    _
  %s6 = ssub.s32 1, %s4
  %s7 = scalar_select 0, %s6, %s4
  $region1: #{tpu_custom_call.1} parent=0
    #allocation3 [shape = 'u8[49152]{0}', space=vmem, size = 0xc000, scoped, tag = 'input window, operand 0']
    #allocation4 [shape = 's32[2]{0}', space=sflag, size = 0x8, scoped, tag = 'scoped memory for tpu_custom_call.1']
    #allocation5 [shape = 's32[2]{0}', space=sflag, size = 0x8, scoped, tag = 'scoped memory for tpu_custom_call.1']
    #allocation6 [shape = 'u8[4096]{0}', space=vmem, size = 0x1000, scoped, tag = 'output window, operand 0']
    %8 = vsyncpa [#allocation4], 0
    %s9 = scalar_lea.sflag [#allocation4], 1
    %10 = vsyncpa %s9, 0
    %11 = vsyncpa [#allocation5], 0
    %s12 = scalar_lea.sflag [#allocation5], 1
    %13 = vsyncpa %s12, 0
    loop: start=0, step=1, limit=4
    $region2: #{tpu_custom_call.1} parent=1 // loop_pre_header
      _
    $region3: #{tpu_custom_call.1} parent=1 // loop_header
      %s15 = sphi 0, %s19
      %p16 = scmp.ge.s32.totalorder %s15, 4
      %s25 = sphi 0, %s27
      %s28 = sphi 0, %s25
      %s29 = sphi 0, %s28
      %s45 = sphi 0, %s29
      %s49 = sphi 0, %s49
      %s51 = sphi 0, %s49
      %s52 = sphi 0, %s51
      %s66 = sphi 0, %s52
      %s70 = sphi 0, %s70
      %s72 = sphi 0, %s70
      %s73 = sphi 0, %s72
      %s87 = sphi 0, %s73
      %s93 = sphi 0, %s95
      %s96 = sphi 0, %s93
      %s97 = sphi 0, %s96
      %s113 = sphi 0, %s97
    $region4: #{tpu_custom_call.1} parent=1 // loop_header_branch
      %18 = sbr.rel (%p16) target = $region8
    $region5: #{tpu_custom_call.1} parent=1 // loop_body
      %s20 = ssub.s32 %s15, 1
      %s21 = ssub.s32 %s15, 2
      %s22 = sadd.s32 %s15, 1
      %s23 = ssub.s32 %s15, %s22
      %p24 = scmp.eq.s32.totalorder %s23, 0
      %s26 = sadd.s32 %s25, 1
      %s27 = scalar_select %p24, %s25, %s26
      %p30 = pneg %p24
      %p31 = scmp.eq.s32.totalorder %s15, 1
      %p32 = por %p30, %p31
      %p33 = scmp.ne.s32.totalorder %s25, %s28
      %p34 = scmp.eq.s32.totalorder %s15, 0
      %p35 = por %p33, %p34
      %p36 = scmp.ne.s32.totalorder %s25, %s28
      %p37 = scmp.eq.s32.totalorder %s20, 1
      %p38 = por %p36, %p37
      %p39 = scmp.ne.s32.totalorder %s28, %s29
      %p40 = scmp.eq.s32.totalorder %s20, 0
      %p41 = por %p39, %p40
      %p42 = scmp.ne.s32.totalorder %s28, %s29
      %p43 = scmp.eq.s32.totalorder %s21, 1
      %p44 = por %p42, %p43
      %p46 = scmp.ne.s32.totalorder %s29, %s45
      %p47 = scmp.eq.s32.totalorder %s21, 0
      %p48 = por %p46, %p47
      %s50 = sadd.s32 %s49, 1
      %p53 = scmp.eq.s32.totalorder %s15, 1
      %p54 = scmp.ne.s32.totalorder %s49, %s51
      %p55 = scmp.eq.s32.totalorder %s15, 0
      %p56 = por %p54, %p55
      %p57 = scmp.ne.s32.totalorder %s49, %s51
      %p58 = scmp.eq.s32.totalorder %s20, 1
      %p59 = por %p57, %p58
      %p60 = scmp.ne.s32.totalorder %s51, %s52
      %p61 = scmp.eq.s32.totalorder %s20, 0
      %p62 = por %p60, %p61
      %p63 = scmp.ne.s32.totalorder %s51, %s52
      %p64 = scmp.eq.s32.totalorder %s21, 1
      %p65 = por %p63, %p64
      %p67 = scmp.ne.s32.totalorder %s52, %s66
      %p68 = scmp.eq.s32.totalorder %s21, 0
      %p69 = por %p67, %p68
      %s71 = sadd.s32 %s70, 1
      %p74 = scmp.eq.s32.totalorder %s15, 1
      %p75 = scmp.ne.s32.totalorder %s70, %s72
      %p76 = scmp.eq.s32.totalorder %s15, 0
      %p77 = por %p75, %p76
      %p78 = scmp.ne.s32.totalorder %s70, %s72
      %p79 = scmp.eq.s32.totalorder %s20, 1
      %p80 = por %p78, %p79
      %p81 = scmp.ne.s32.totalorder %s72, %s73
      %p82 = scmp.eq.s32.totalorder %s20, 0
      %p83 = por %p81, %p82
      %p84 = scmp.ne.s32.totalorder %s72, %s73
      %p85 = scmp.eq.s32.totalorder %s21, 1
      %p86 = por %p84, %p85
      %p88 = scmp.ne.s32.totalorder %s73, %s87
      %p89 = scmp.eq.s32.totalorder %s21, 0
      %p90 = por %p88, %p89
      %s91 = ssub.s32 %s15, %s22
      %p92 = scmp.eq.s32.totalorder %s91, 0
      %s94 = sadd.s32 %s93, 1
      %s95 = scalar_select %p92, %s93, %s94
      %p98 = pneg %p92
      %p99 = scmp.eq.s32.totalorder %s15, 1
      %p100 = por %p98, %p99
      %p101 = scmp.ne.s32.totalorder %s93, %s96
      %p102 = scmp.eq.s32.totalorder %s15, 0
      %p103 = por %p101, %p102
      %p104 = scmp.ne.s32.totalorder %s93, %s96
      %p105 = scmp.eq.s32.totalorder %s20, 1
      %p106 = por %p104, %p105
      %p107 = scmp.ne.s32.totalorder %s96, %s97
      %p108 = scmp.eq.s32.totalorder %s20, 0
      %p109 = por %p107, %p108
      %p110 = scmp.ne.s32.totalorder %s96, %s97
      %p111 = scmp.eq.s32.totalorder %s21, 1
      %p112 = por %p110, %p111
      %p114 = scmp.ne.s32.totalorder %s97, %s113
      %p115 = scmp.eq.s32.totalorder %s21, 0
      %p116 = por %p114, %p115
      %p117 = scmp.le.s32.totalorder 1, %s15
      %p118 = scmp.lt.s32.totalorder %s15, 3
      %p119 = pnand %p117, %p118
      %p120 = pneg %p119
      // Predicated region
      $region9: #{tpu_custom_call.1} parent=5 // pred_check
        _
      $region10: #{tpu_custom_call.1} parent=5 // pred_check_branch
        %122 = sbr.rel (%p119) target = $region12
      $region11: #{tpu_custom_call.1} parent=5 // pred_region
        %s123 = ssub.s32 %s15, 1
        // Predicated region
        $region13: #{tpu_custom_call.1} parent=11 // pred_check
          %p124 = pneg %p62
        $region14: #{tpu_custom_call.1} parent=11 // pred_check_branch
          %126 = sbr.rel (%p124) target = $region16
        $region15: #{tpu_custom_call.1} parent=11 // pred_region
          _
        $region16: #{tpu_custom_call.1} parent=11 // pred_fallthru
          _
        // Predicated region
        $region17: #{tpu_custom_call.1} parent=11 // pred_check
          %p127 = pneg %p83
        $region18: #{tpu_custom_call.1} parent=11 // pred_check_branch
          %129 = sbr.rel (%p127) target = $region20
        $region19: #{tpu_custom_call.1} parent=11 // pred_region
          _
        $region20: #{tpu_custom_call.1} parent=11 // pred_fallthru
          _
      $region12: #{tpu_custom_call.1} parent=5 // pred_fallthru
        _
      %p130 = scmp.lt.s32.totalorder %s15, 2
      // Predicated region
      $region21: #{tpu_custom_call.1} parent=5 // pred_check
        %p131 = pneg %p130
      $region22: #{tpu_custom_call.1} parent=5 // pred_check_branch
        %133 = sbr.rel (%p131) target = $region24
      $region23: #{tpu_custom_call.1} parent=5 // pred_region
        // Predicated region
        $region25: #{tpu_custom_call.1} parent=23 // pred_check
          %p134 = pneg %p35
        $region26: #{tpu_custom_call.1} parent=23 // pred_check_branch
          %136 = sbr.rel (%p134) target = $region28
        $region27: #{tpu_custom_call.1} parent=23 // pred_region
          %s137 = sand.u32 %s25, 1
          %s138 = scalar_lea.sflag [#allocation4], %s137
          %s139 = sand.u32 %s25, 1
          %s140 = smul.addr %s139, 48
          %s141 = scalar_lea.vmem [#allocation3], %s140
          %s142 = smul.u32 3, %s15
          %s144 = ssub.s32 768, 768
          %145 = vsyncadd %s138, %s144
          %s146 = smul.addr %s142, 2
          %s147 = smul.addr %s146, 128
          %s148 = scalar_lea.hbm %s0, %s147
          %s149 = sshll.u32 %s141, 4
          %s150 = int_to_ptr.vmem [resolvable:$true] %s149
          %155 = dma.hbm_to_vmem [thread:$0]  %s148, 768, %s150, %s138, 128, 128, 8
        $region28: #{tpu_custom_call.1} parent=23 // pred_fallthru
          _
      $region24: #{tpu_custom_call.1} parent=5 // pred_fallthru
        _
      %p156 = scmp.le.s32.totalorder 1, %s15
      %p157 = scmp.lt.s32.totalorder %s15, 3
      %p158 = pnand %p156, %p157
      %p159 = pneg %p158
      // Predicated region
      $region29: #{tpu_custom_call.1} parent=5 // pred_check
        _
      $region30: #{tpu_custom_call.1} parent=5 // pred_check_branch
        %161 = sbr.rel (%p158) target = $region32
      $region31: #{tpu_custom_call.1} parent=5 // pred_region
        %s162 = ssub.s32 %s15, 1
        %s163 = sand.u32 %s28, 1
        %s164 = scalar_lea.sflag [#allocation4], %s163
        %s165 = sand.u32 %s28, 1
        %s166 = smul.addr %s165, 48
        %s167 = scalar_lea.vmem [#allocation3], %s166
        // Predicated region
        $region33: #{tpu_custom_call.1} parent=31 // pred_check
          %p168 = pneg %p41
        $region34: #{tpu_custom_call.1} parent=31 // pred_check_branch
          %170 = sbr.rel (%p168) target = $region36
        $region35: #{tpu_custom_call.1} parent=31 // pred_region
          %171 = dma.done %s164, 768
        $region36: #{tpu_custom_call.1} parent=31 // pred_fallthru
          _
        %s172 = sand.u32 %s28, 1
        %s173 = scalar_lea.sflag [#allocation4], %s172
        %s174 = sand.u32 %s28, 1
        %s175 = smul.addr %s174, 48
        %s176 = scalar_lea.vmem [#allocation3], %s175
        %p177 = pneg %p41
        %p178 = pneg %p38
        %p179 = pneg %p62
        %p180 = pneg %p59
        %p181 = pneg %p83
        %p182 = pneg %p80
        %p183 = pneg %p109
        %p184 = pneg %p106
        %s185 = sand.u32 %s96, 1
        %s186 = scalar_lea.sflag [#allocation5], %s185
        %s187 = sand.u32 %s96, 1
        %s188 = smul.addr %s187, 4
        %s189 = scalar_lea.vmem [#allocation6], %s188
        %s190 = smul.u32 3, %s20
        %v191 = vld [vmem:[%s167] sm:$0xff]
        %v192 = vld [vmem:[%s167 + $0x8] sm:$0xff]
        %v193 = vld [vmem:[%s1] sm:$0xff]
        %v194 = vld [vmem:[%s1 + $0x8] sm:$0xff]
        %vm195 = vcmask 130048
        %v197 = vsel %vm195, %v191, 0
        %v200 = vsel %vm195, %v192, 0
        %202 = vmatprep.subr.mxu0 0.0
        %203 = vmatpush1.msra.mxu0 %v193
        %204 = vmatprep.subr.mxu0 0.0
        %205 = vmatpush1.msra.mxu0 %v194
        %206 = vmatprep.subr.mxu0 0.0
        %207 = vmatpush1.msra.mxu0 0.0
        %208 = vmatprep.subr.mxu0 0.0
        %209 = vmatpush1.msra.mxu0 0.0
        %210 = vmatprep.subr.mxu0 0.0
        %211 = vmatpush1.msra.mxu0 0.0
        %212 = vmatprep.subr.mxu0 0.0
        %213 = vmatpush1.msra.mxu0 0.0
        %214 = vmatprep.subr.mxu0 0.0
        %215 = vmatpush1.msra.mxu0 0.0
        %216 = vmatprep.subr.mxu0 0.0
        %217 = vmatpush1.msra.mxu0 0.0
        %218 = vmatprep.subr.mxu0 0.0
        %219 = vmatpush1.msra.mxu0 0.0
        %220 = vmatprep.subr.mxu0 0.0
        %221 = vmatpush1.msra.mxu0 0.0
        %222 = vmatprep.subr.mxu0 0.0
        %223 = vmatpush1.msra.mxu0 0.0
        %224 = vmatprep.subr.mxu0 0.0
        %225 = vmatpush1.msra.mxu0 0.0
        %226 = vmatprep.subr.mxu0 0.0
        %227 = vmatpush1.msra.mxu0 0.0
        %228 = vmatprep.subr.mxu0 0.0
        %229 = vmatpush1.msra.mxu0 0.0
        %230 = vmatprep.subr.mxu0 0.0
        %231 = vmatpush1.msra.mxu0 0.0
        %232 = vmatprep.subr.mxu0 0.0
        %233 = vmatpush1.msra.mxu0 0.0
        %234 = vmatprep.subr.mxu0 0.0
        %235 = vmatpush1.msra.mxu0 0.0
        %236 = vmatprep.subr.mxu0 0.0
        %237 = vmatpush1.msra.mxu0 0.0
        %238 = vmatprep.subr.mxu0 0.0
        %239 = vmatpush1.msra.mxu0 0.0
        %240 = vmatprep.subr.mxu0 0.0
        %241 = vmatpush1.msra.mxu0 0.0
        %242 = vmatprep.subr.mxu0 0.0
        %243 = vmatpush1.msra.mxu0 0.0
        %244 = vmatprep.subr.mxu0 0.0
        %245 = vmatpush1.msra.mxu0 0.0
        %246 = vmatprep.subr.mxu0 0.0
        %247 = vmatpush1.msra.mxu0 0.0
        %248 = vmatprep.subr.mxu0 0.0
        %249 = vmatpush1.msra.mxu0 0.0
        %250 = vmatprep.subr.mxu0 0.0
        %251 = vmatpush1.msra.mxu0 0.0
        %252 = vmatprep.subr.mxu0 0.0
        %253 = vmatpush1.msra.mxu0 0.0
        %254 = vmatprep.subr.mxu0 0.0
        %255 = vmatpush1.msra.mxu0 0.0
        %256 = vmatprep.subr.mxu0 0.0
        %257 = vmatpush1.msra.mxu0 0.0
        %258 = vmatprep.subr.mxu0 0.0
        %259 = vmatpush1.msra.mxu0 0.0
        %260 = vmatprep.subr.mxu0 0.0
        %261 = vmatpush1.msra.mxu0 0.0
        %262 = vmatprep.subr.mxu0 0.0
        %263 = vmatpush1.msra.mxu0 0.0
        %264 = vmatprep.subr.mxu0 0.0
        %265 = vmatpush1.msra.mxu0 0.0
        %266 = vmatprep.mubr.f32.mxu0 0.0
        %267 = vmatmul.mubr.f32.gmra.mrb[0].mxu0 %v197
        %v268 = vpop.f32.mrb[0].mxu0
        %v269 = vadd.f32 0.0, %v268
        %v270 = vpop.f32.mrb[0].mxu0
        %271 = vmatprep.mubr.f32.mxu0 0.0
        %272 = vmatmul.mubr.f32.gmra.mrb[0].mxu0 %v200
        %v273 = vpop.f32.mrb[0].mxu0
        %v274 = vadd.f32 0.0, %v273
        %v275 = vpop.f32.mrb[0].mxu0
        %276 = vdwg.mxu0
        %vm277 = vcmask 31744
        %278 = vst.msk [vmem:[#allocation2] sm:$0xff] %vm277, %v269
        %279 = vst.msk [vmem:[#allocation2 + $0x8] sm:$0xff] %vm277, %v274
        %s280 = scalar_lea.vmem %s167, 16 [#allocation3]
        %v281 = vld [vmem:[%s280] sm:$0xff]
        %v282 = vld [vmem:[%s280 + $0x8] sm:$0xff]
        %v283 = vld [vmem:[%s1] sm:$0xff]
        %v284 = vld [vmem:[%s1 + $0x8] sm:$0xff]
        %v286 = vsel %vm195, %v281, 0
        %v289 = vsel %vm195, %v282, 0
        %291 = vmatprep.subr.mxu0 0.0
        %292 = vmatpush1.msra.mxu0 %v283
        %293 = vmatprep.subr.mxu0 0.0
        %294 = vmatpush1.msra.mxu0 %v284
        %295 = vmatprep.subr.mxu0 0.0
        %296 = vmatpush1.msra.mxu0 0.0
        %297 = vmatprep.subr.mxu0 0.0
        %298 = vmatpush1.msra.mxu0 0.0
        %299 = vmatprep.subr.mxu0 0.0
        %300 = vmatpush1.msra.mxu0 0.0
        %301 = vmatprep.subr.mxu0 0.0
        %302 = vmatpush1.msra.mxu0 0.0
        %303 = vmatprep.subr.mxu0 0.0
        %304 = vmatpush1.msra.mxu0 0.0
        %305 = vmatprep.subr.mxu0 0.0
        %306 = vmatpush1.msra.mxu0 0.0
        %307 = vmatprep.subr.mxu0 0.0
        %308 = vmatpush1.msra.mxu0 0.0
        %309 = vmatprep.subr.mxu0 0.0
        %310 = vmatpush1.msra.mxu0 0.0
        %311 = vmatprep.subr.mxu0 0.0
        %312 = vmatpush1.msra.mxu0 0.0
        %313 = vmatprep.subr.mxu0 0.0
        %314 = vmatpush1.msra.mxu0 0.0
        %315 = vmatprep.subr.mxu0 0.0
        %316 = vmatpush1.msra.mxu0 0.0
        %317 = vmatprep.subr.mxu0 0.0
        %318 = vmatpush1.msra.mxu0 0.0
        %319 = vmatprep.subr.mxu0 0.0
        %320 = vmatpush1.msra.mxu0 0.0
        %321 = vmatprep.subr.mxu0 0.0
        %322 = vmatpush1.msra.mxu0 0.0
        %323 = vmatprep.subr.mxu0 0.0
        %324 = vmatpush1.msra.mxu0 0.0
        %325 = vmatprep.subr.mxu0 0.0
        %326 = vmatpush1.msra.mxu0 0.0
        %327 = vmatprep.subr.mxu0 0.0
        %328 = vmatpush1.msra.mxu0 0.0
        %329 = vmatprep.subr.mxu0 0.0
        %330 = vmatpush1.msra.mxu0 0.0
        %331 = vmatprep.subr.mxu0 0.0
        %332 = vmatpush1.msra.mxu0 0.0
        %333 = vmatprep.subr.mxu0 0.0
        %334 = vmatpush1.msra.mxu0 0.0
        %335 = vmatprep.subr.mxu0 0.0
        %336 = vmatpush1.msra.mxu0 0.0
        %337 = vmatprep.subr.mxu0 0.0
        %338 = vmatpush1.msra.mxu0 0.0
        %339 = vmatprep.subr.mxu0 0.0
        %340 = vmatpush1.msra.mxu0 0.0
        %341 = vmatprep.subr.mxu0 0.0
        %342 = vmatpush1.msra.mxu0 0.0
        %343 = vmatprep.subr.mxu0 0.0
        %344 = vmatpush1.msra.mxu0 0.0
        %345 = vmatprep.subr.mxu0 0.0
        %346 = vmatpush1.msra.mxu0 0.0
        %347 = vmatprep.subr.mxu0 0.0
        %348 = vmatpush1.msra.mxu0 0.0
        %349 = vmatprep.subr.mxu0 0.0
        %350 = vmatpush1.msra.mxu0 0.0
        %351 = vmatprep.subr.mxu0 0.0
        %352 = vmatpush1.msra.mxu0 0.0
        %353 = vmatprep.subr.mxu0 0.0
        %354 = vmatpush1.msra.mxu0 0.0
        %355 = vmatprep.mubr.f32.mxu0 0.0
        %356 = vmatmul.mubr.f32.gmra.mrb[0].mxu0 %v286
        %v357 = vpop.f32.mrb[0].mxu0
        %v358 = vadd.f32 0.0, %v357
        %v359 = vpop.f32.mrb[0].mxu0
        %360 = vmatprep.mubr.f32.mxu0 0.0
        %361 = vmatmul.mubr.f32.gmra.mrb[0].mxu0 %v289
        %v362 = vpop.f32.mrb[0].mxu0
        %v363 = vadd.f32 0.0, %v362
        %v364 = vpop.f32.mrb[0].mxu0
        %365 = vdwg.mxu0
        %368 = vrot.lane.b32.xlu0 %v358, 4
        %v369 = vpop.permute.xlu0 %368
        %370 = vrot.lane.b32.xlu0 %v363, 4
        %v371 = vpop.permute.xlu0 %370
        %vm374 = vcmask 64544
        %375 = vst.msk [vmem:[#allocation2] sm:$0xff] %vm374, %v369
        %376 = vst.msk [vmem:[#allocation2 + $0x8] sm:$0xff] %vm374, %v371
        %s377 = scalar_lea.vmem %s167, 32 [#allocation3]
        %v378 = vld [vmem:[%s377] sm:$0xff]
        %v379 = vld [vmem:[%s377 + $0x8] sm:$0xff]
        %v380 = vld [vmem:[%s1] sm:$0xff]
        %v381 = vld [vmem:[%s1 + $0x8] sm:$0xff]
        %v383 = vsel %vm195, %v378, 0
        %v386 = vsel %vm195, %v379, 0
        %388 = vmatprep.subr.mxu0 0.0
        %389 = vmatpush1.msra.mxu0 %v380
        %390 = vmatprep.subr.mxu0 0.0
        %391 = vmatpush1.msra.mxu0 %v381
        %392 = vmatprep.subr.mxu0 0.0
        %393 = vmatpush1.msra.mxu0 0.0
        %394 = vmatprep.subr.mxu0 0.0
        %395 = vmatpush1.msra.mxu0 0.0
        %396 = vmatprep.subr.mxu0 0.0
        %397 = vmatpush1.msra.mxu0 0.0
        %398 = vmatprep.subr.mxu0 0.0
        %399 = vmatpush1.msra.mxu0 0.0
        %400 = vmatprep.subr.mxu0 0.0
        %401 = vmatpush1.msra.mxu0 0.0
        %402 = vmatprep.subr.mxu0 0.0
        %403 = vmatpush1.msra.mxu0 0.0
        %404 = vmatprep.subr.mxu0 0.0
        %405 = vmatpush1.msra.mxu0 0.0
        %406 = vmatprep.subr.mxu0 0.0
        %407 = vmatpush1.msra.mxu0 0.0
        %408 = vmatprep.subr.mxu0 0.0
        %409 = vmatpush1.msra.mxu0 0.0
        %410 = vmatprep.subr.mxu0 0.0
        %411 = vmatpush1.msra.mxu0 0.0
        %412 = vmatprep.subr.mxu0 0.0
        %413 = vmatpush1.msra.mxu0 0.0
        %414 = vmatprep.subr.mxu0 0.0
        %415 = vmatpush1.msra.mxu0 0.0
        %416 = vmatprep.subr.mxu0 0.0
        %417 = vmatpush1.msra.mxu0 0.0
        %418 = vmatprep.subr.mxu0 0.0
        %419 = vmatpush1.msra.mxu0 0.0
        %420 = vmatprep.subr.mxu0 0.0
        %421 = vmatpush1.msra.mxu0 0.0
        %422 = vmatprep.subr.mxu0 0.0
        %423 = vmatpush1.msra.mxu0 0.0
        %424 = vmatprep.subr.mxu0 0.0
        %425 = vmatpush1.msra.mxu0 0.0
        %426 = vmatprep.subr.mxu0 0.0
        %427 = vmatpush1.msra.mxu0 0.0
        %428 = vmatprep.subr.mxu0 0.0
        %429 = vmatpush1.msra.mxu0 0.0
        %430 = vmatprep.subr.mxu0 0.0
        %431 = vmatpush1.msra.mxu0 0.0
        %432 = vmatprep.subr.mxu0 0.0
        %433 = vmatpush1.msra.mxu0 0.0
        %434 = vmatprep.subr.mxu0 0.0
        %435 = vmatpush1.msra.mxu0 0.0
        %436 = vmatprep.subr.mxu0 0.0
        %437 = vmatpush1.msra.mxu0 0.0
        %438 = vmatprep.subr.mxu0 0.0
        %439 = vmatpush1.msra.mxu0 0.0
        %440 = vmatprep.subr.mxu0 0.0
        %441 = vmatpush1.msra.mxu0 0.0
        %442 = vmatprep.subr.mxu0 0.0
        %443 = vmatpush1.msra.mxu0 0.0
        %444 = vmatprep.subr.mxu0 0.0
        %445 = vmatpush1.msra.mxu0 0.0
        %446 = vmatprep.subr.mxu0 0.0
        %447 = vmatpush1.msra.mxu0 0.0
        %448 = vmatprep.subr.mxu0 0.0
        %449 = vmatpush1.msra.mxu0 0.0
        %450 = vmatprep.subr.mxu0 0.0
        %451 = vmatpush1.msra.mxu0 0.0
        %452 = vmatprep.mubr.f32.mxu0 0.0
        %453 = vmatmul.mubr.f32.gmra.mrb[0].mxu0 %v383
        %v454 = vpop.f32.mrb[0].mxu0
        %v455 = vadd.f32 0.0, %v454
        %v456 = vpop.f32.mrb[0].mxu0
        %457 = vmatprep.mubr.f32.mxu0 0.0
        %458 = vmatmul.mubr.f32.gmra.mrb[0].mxu0 %v386
        %v459 = vpop.f32.mrb[0].mxu0
        %v460 = vadd.f32 0.0, %v459
        %v461 = vpop.f32.mrb[0].mxu0
        %462 = vdwg.mxu0
        %465 = vrot.lane.b32.xlu0 %v455, 8
        %v466 = vpop.permute.xlu0 %465
        %467 = vrot.lane.b32.xlu0 %v460, 8
        %v468 = vpop.permute.xlu0 %467
        %vm471 = vcmask 97344
        %472 = vst.msk [vmem:[#allocation2] sm:$0xff] %vm471, %v466
        %473 = vst.msk [vmem:[#allocation2 + $0x8] sm:$0xff] %vm471, %v468
        %v474 = vld [vmem:[%s2] sm:$0xf]
        %v475 = vld [vmem:[#allocation2] sm:$0xff]
        %v476 = vld [vmem:[#allocation2 + $0x8] sm:$0xff]
        %v478 = vsel %vm195, %v474, 0
        %480 = vmatprep.subr.mxu0 0.0
        %481 = vmatpush1.msra.mxu0 %v475
        %482 = vmatprep.subr.mxu0 0.0
        %483 = vmatpush1.msra.mxu0 %v476
        %484 = vmatprep.subr.mxu0 0.0
        %485 = vmatpush1.msra.mxu0 0.0
        %486 = vmatprep.subr.mxu0 0.0
        %487 = vmatpush1.msra.mxu0 0.0
        %488 = vmatprep.subr.mxu0 0.0
        %489 = vmatpush1.msra.mxu0 0.0
        %490 = vmatprep.subr.mxu0 0.0
        %491 = vmatpush1.msra.mxu0 0.0
        %492 = vmatprep.subr.mxu0 0.0
        %493 = vmatpush1.msra.mxu0 0.0
        %494 = vmatprep.subr.mxu0 0.0
        %495 = vmatpush1.msra.mxu0 0.0
        %496 = vmatprep.subr.mxu0 0.0
        %497 = vmatpush1.msra.mxu0 0.0
        %498 = vmatprep.subr.mxu0 0.0
        %499 = vmatpush1.msra.mxu0 0.0
        %500 = vmatprep.subr.mxu0 0.0
        %501 = vmatpush1.msra.mxu0 0.0
        %502 = vmatprep.subr.mxu0 0.0
        %503 = vmatpush1.msra.mxu0 0.0
        %504 = vmatprep.subr.mxu0 0.0
        %505 = vmatpush1.msra.mxu0 0.0
        %506 = vmatprep.subr.mxu0 0.0
        %507 = vmatpush1.msra.mxu0 0.0
        %508 = vmatprep.subr.mxu0 0.0
        %509 = vmatpush1.msra.mxu0 0.0
        %510 = vmatprep.subr.mxu0 0.0
        %511 = vmatpush1.msra.mxu0 0.0
        %512 = vmatprep.subr.mxu0 0.0
        %513 = vmatpush1.msra.mxu0 0.0
        %514 = vmatprep.subr.mxu0 0.0
        %515 = vmatpush1.msra.mxu0 0.0
        %516 = vmatprep.subr.mxu0 0.0
        %517 = vmatpush1.msra.mxu0 0.0
        %518 = vmatprep.subr.mxu0 0.0
        %519 = vmatpush1.msra.mxu0 0.0
        %520 = vmatprep.subr.mxu0 0.0
        %521 = vmatpush1.msra.mxu0 0.0
        %522 = vmatprep.subr.mxu0 0.0
        %523 = vmatpush1.msra.mxu0 0.0
        %524 = vmatprep.subr.mxu0 0.0
        %525 = vmatpush1.msra.mxu0 0.0
        %526 = vmatprep.subr.mxu0 0.0
        %527 = vmatpush1.msra.mxu0 0.0
        %528 = vmatprep.subr.mxu0 0.0
        %529 = vmatpush1.msra.mxu0 0.0
        %530 = vmatprep.subr.mxu0 0.0
        %531 = vmatpush1.msra.mxu0 0.0
        %532 = vmatprep.subr.mxu0 0.0
        %533 = vmatpush1.msra.mxu0 0.0
        %534 = vmatprep.subr.mxu0 0.0
        %535 = vmatpush1.msra.mxu0 0.0
        %536 = vmatprep.subr.mxu0 0.0
        %537 = vmatpush1.msra.mxu0 0.0
        %538 = vmatprep.subr.mxu0 0.0
        %539 = vmatpush1.msra.mxu0 0.0
        %540 = vmatprep.subr.mxu0 0.0
        %541 = vmatpush1.msra.mxu0 0.0
        %542 = vmatprep.subr.mxu0 0.0
        %543 = vmatpush1.msra.mxu0 0.0
        %544 = vmatprep.mubr.f32.mxu0 0.0
        %545 = vmatmul.mubr.f32.gmra.mrb[0].mxu0 %v478
        %v546 = vpop.f32.mrb[0].mxu0
        %v547 = vadd.f32 0.0, %v546
        %v548 = vpop.f32.mrb[0].mxu0
        %549 = vdwg.mxu0
        %vm550 = vcmask 93184
        %551 = vst.msk [vmem:[%s189] sm:$0xf] %vm550, %v547
        %s552 = sand.u32 %s96, 1
        %s553 = scalar_lea.sflag [#allocation5], %s552
        %s554 = sand.u32 %s96, 1
        %s555 = smul.addr %s554, 4
        %s556 = scalar_lea.vmem [#allocation6], %s555
        // Predicated region
        $region37: #{tpu_custom_call.1} parent=31 // pred_check
          %p557 = pneg %p106
        $region38: #{tpu_custom_call.1} parent=31 // pred_check_branch
          %559 = sbr.rel (%p557) target = $region40
        $region39: #{tpu_custom_call.1} parent=31 // pred_region
          %s561 = ssub.s32 64, 64
          %562 = vsyncadd %s553, %s561
          %s563 = smul.addr %s20, 64
          %s564 = scalar_lea.hbm %s3, %s563
          %s566 = sshll.u32 %s556, 4
          %s567 = int_to_ptr.vmem [resolvable:$true] %s566
          %569 = dma.vmem_to_hbm [thread:$0]  %s567, 64, %s564, %s553
        $region40: #{tpu_custom_call.1} parent=31 // pred_fallthru
          _
      $region32: #{tpu_custom_call.1} parent=5 // pred_fallthru
        _
      %p570 = scmp.le.s32.totalorder 2, %s15
      // Predicated region
      $region41: #{tpu_custom_call.1} parent=5 // pred_check
        %p571 = pneg %p570
      $region42: #{tpu_custom_call.1} parent=5 // pred_check_branch
        %573 = sbr.rel (%p571) target = $region44
      $region43: #{tpu_custom_call.1} parent=5 // pred_region
        %s574 = ssub.s32 %s15, 2
        // Predicated region
        $region45: #{tpu_custom_call.1} parent=43 // pred_check
          %p575 = pneg %p112
        $region46: #{tpu_custom_call.1} parent=43 // pred_check_branch
          %577 = sbr.rel (%p575) target = $region48
        $region47: #{tpu_custom_call.1} parent=43 // pred_region
          %s578 = sand.u32 %s97, 1
          %s579 = scalar_lea.sflag [#allocation5], %s578
          %s580 = sand.u32 %s97, 1
          %s581 = smul.addr %s580, 4
          %s582 = scalar_lea.vmem [#allocation6], %s581
          %583 = dma.done %s579, 64
        $region48: #{tpu_custom_call.1} parent=43 // pred_fallthru
          _
      $region44: #{tpu_custom_call.1} parent=5 // pred_fallthru
        _
    $region6: #{tpu_custom_call.1} parent=1 // loop_footer
      %s19 = sadd.s32 1, %s15
    $region7: #{tpu_custom_call.1} parent=1 // loop_footer_branch
      %14 = sbr.rel target = $region3
    $region8: #{tpu_custom_call.1} parent=1 // loop_exit
      _
    %584 = vsyncpa [#allocation4], 1
    %s585 = scalar_lea.sflag [#allocation4], 1
    %586 = vsyncpa %s585, 1
    %587 = vsyncpa [#allocation5], 1
    %s588 = scalar_lea.sflag [#allocation5], 1
    %589 = vsyncpa %s588, 1

</llo_original>
